<compile_context>
chip_gen: v6e
topology: v6e:2x2x1
jax: 0.10.0
libtpu: 0.0.40
codegen_flags: <defaults>
</compile_context>

<pallas_src>
import jax
import jax.numpy as jnp
from jax.experimental import pallas as pl
from jax.experimental.pallas import tpu as pltpu

_EPS = 1e-6


def simple_gate_kernel(x_ref, gamma_ref, beta_ref, w1a_ref, b1a_ref,
                       w1b_ref, b1b_ref, w2_ref, b2_ref, scale_ref, o_ref):
    # x_ref block: (C, tm) — channels on sublanes, pixels on lanes (lane-dense).
    f32 = jnp.float32
    x = x_ref[...].astype(f32)

    # channels_first LayerNorm == per-pixel normalization over the channel (sublane) axis,
    # biased variance, matching (x - u).pow(2).mean(1).
    u = jnp.mean(x, axis=0, keepdims=True)          # (1, tm)
    d = x - u
    s = jnp.mean(d * d, axis=0, keepdims=True)      # (1, tm)
    xn = d * jax.lax.rsqrt(s + _EPS)
    xn = gamma_ref[...].astype(f32) * xn + beta_ref[...].astype(f32)

    # Conv1 (1x1 conv == per-pixel matmul over channels), pre-split into the two
    # torch.chunk halves: `a` = first half, `g` = second half; gate g * a.
    a = jnp.dot(w1a_ref[...].astype(f32), xn, preferred_element_type=f32) \
        + b1a_ref[...].astype(f32)
    g = jnp.dot(w1b_ref[...].astype(f32), xn, preferred_element_type=f32) \
        + b1b_ref[...].astype(f32)
    g = g * a

    # Conv2 (1x1), C -> C.
    y = jnp.dot(w2_ref[...].astype(f32), g, preferred_element_type=f32) \
        + b2_ref[...].astype(f32)

    # out = y * scale + shortcut.  Re-read the VMEM-resident x tile for the residual
    # instead of holding a live f32 copy across both matmuls.
    o_ref[...] = (y * scale_ref[...].astype(f32)
                  + x_ref[...].astype(f32)).astype(o_ref.dtype)


def simple_gate(x_nchw, gamma, beta, w1, b1, w2, b2, scale, *, tm=2048):
    """SimpleGate forward.

    x_nchw: (N, C, H, W).
    gamma, beta, b2, scale: (C,)   — per-channel params.
    w1: (2C, C)  b1: (2C,)         — Conv1 weight/bias in (out, in) conv layout.
    w2: (C, C)                     — Conv2 weight in (out, in) conv layout.
    tm: pixels per tile (lane dim); clamped / rounded to keep lane-dense blocks.
    """
    N, C, H, W = x_nchw.shape
    HW = H * W

    # Pixel-tile size: as large as requested, multiple of 128 (or the full extent).
    tm_eff = min(tm, HW)
    if tm_eff != HW:
        tm_eff = max(128, (tm_eff // 128) * 128)
        if tm_eff >= HW:
            tm_eff = HW
    n_tiles = pl.cdiv(HW, tm_eff)   # partial final tile handled by masked stores

    # Free reshape (no transpose, NCHW is already contiguous as (N, C, H*W)).
    x3 = x_nchw.reshape(N, C, HW)

    # Pre-split Conv1 into the torch.chunk halves -> no misaligned channel slicing in-kernel.
    w1a, w1b = w1[:C, :], w1[C:, :]
    b1a, b1b = b1[:C], b1[C:]

    col = lambda v: v.reshape(C, 1)   # per-channel params as (C, 1) columns (broadcast over lanes)
    gamma_c, beta_c = col(gamma), col(beta)
    b1a_c, b1b_c = col(b1a), col(b1b)
    b2_c, scale_c = col(b2), col(scale)

    row_spec = pl.BlockSpec((None, C, tm_eff), lambda n, j: (n, 0, j))
    spec_cc = pl.BlockSpec((C, C), lambda n, j: (0, 0))
    spec_c1 = pl.BlockSpec((C, 1), lambda n, j: (0, 0))

    out3 = pl.pallas_call(
        simple_gate_kernel,
        out_shape=jax.ShapeDtypeStruct((N, C, HW), x_nchw.dtype),
        grid_spec=pltpu.PrefetchScalarGridSpec(
            num_scalar_prefetch=0,
            grid=(N, n_tiles),
            in_specs=[
                row_spec,   # x tile (C, tm)
                spec_c1,    # LN weight (gamma)
                spec_c1,    # LN bias (beta)
                spec_cc,    # Conv1 weight, first chunk half
                spec_c1,    # Conv1 bias, first chunk half
                spec_cc,    # Conv1 weight, second chunk half
                spec_c1,    # Conv1 bias, second chunk half
                spec_cc,    # Conv2 weight
                spec_c1,    # Conv2 bias
                spec_c1,    # scale
            ],
            out_specs=row_spec,
        ),
        compiler_params=pltpu.CompilerParams(
            dimension_semantics=("parallel", "parallel"),
            # Raise the scoped-VMEM default (16 MiB on v5e / 32 MiB on v6e-v7x) so big-C,
            # big-tm configurations still double-buffer; stays well under v7x's 64 MiB.
            vmem_limit_bytes=48 * 1024 * 1024,
        ),
    )(x3, gamma_c, beta_c, w1a, b1a_c, w1b, b1b_c, w2, b2_c, scale_c)

    return out3.reshape(N, C, H, W)


def simple_gate_ref(x, gamma, beta, w1, b1, w2, b2, scale, eps=_EPS):
    """Pure-JAX reference in NCHW, mirroring the PyTorch math."""
    u = jnp.mean(x, axis=1, keepdims=True)
    s = jnp.mean((x - u) ** 2, axis=1, keepdims=True)
    xn = (x - u) / jnp.sqrt(s + eps)
    xn = gamma[None, :, None, None] * xn + beta[None, :, None, None]
    h = jnp.einsum('oc,nchw->nohw', w1, xn) + b1[None, :, None, None]
    C = x.shape[1]
    a, g = h[:, :C], h[:, C:]
    y = jnp.einsum('oc,nchw->nohw', w2, g * a) + b2[None, :, None, None]
    return y * scale[None, :, None, None] + x


if __name__ == "__main__":
    key = jax.random.PRNGKey(0)
    N, C, H, W = 2, 4, 16, 16          # n_feats = 4
    ks = jax.random.split(key, 6)

    x = jax.random.normal(ks[0], (N, C, H, W), jnp.float32)

    # LayerNorm params follow the module __init__ (ones / zeros).
    gamma = jnp.ones((C,), jnp.float32)
    beta = jnp.zeros((C,), jnp.float32)
    # 1x1 conv weights in (out_ch, in_ch) layout (= PyTorch (out, in, 1, 1) squeezed).
    w1 = jax.random.normal(ks[1], (2 * C, C), jnp.float32) * 0.1
    b1 = jax.random.normal(ks[2], (2 * C,), jnp.float32) * 0.1
    w2 = jax.random.normal(ks[3], (C, C), jnp.float32) * 0.1
    b2 = jax.random.normal(ks[4], (C,), jnp.float32) * 0.1
    # PyTorch inits `scale` to zeros (output would equal shortcut); use deterministic
    # nonzero values here so the gated path is actually exercised.
    scale = jax.random.normal(ks[5], (C,), jnp.float32) * 0.1

    out = simple_gate(x, gamma, beta, w1, b1, w2, b2, scale)
    out = jax.block_until_ready(out)

    ref = simple_gate_ref(x, gamma, beta, w1, b1, w2, b2, scale)
    assert out.shape == x.shape and out.dtype == x.dtype
    assert jnp.allclose(out, ref, atol=1e-4, rtol=1e-4), (
        f"max abs err {float(jnp.max(jnp.abs(out - ref)))}")
    print("KERNEL_OK")
</pallas_src>

<mosaic_0001>
module attributes {stable_mosaic.version = 11 : i64} {
  func.func @simple_gate_kernel(%arg0: i32, %arg1: i32, %arg2: memref<1x4x256xf32, #tpu.memory_space<vmem>>, %arg3: memref<4x1xf32, #tpu.memory_space<vmem>>, %arg4: memref<4x1xf32, #tpu.memory_space<vmem>>, %arg5: memref<4x4xf32, #tpu.memory_space<vmem>>, %arg6: memref<4x1xf32, #tpu.memory_space<vmem>>, %arg7: memref<4x4xf32, #tpu.memory_space<vmem>>, %arg8: memref<4x1xf32, #tpu.memory_space<vmem>>, %arg9: memref<4x4xf32, #tpu.memory_space<vmem>>, %arg10: memref<4x1xf32, #tpu.memory_space<vmem>>, %arg11: memref<4x1xf32, #tpu.memory_space<vmem>>, %arg12: memref<1x4x256xf32, #tpu.memory_space<vmem>>) attributes {dimension_semantics = [#tpu.dimension_semantics<parallel>, #tpu.dimension_semantics<parallel>], iteration_bounds = array<i64: 2, 1>, scalar_prefetch = 0 : i64, scratch_operands = 0 : i64, tpu.core_type = #tpu.core_type<tc>, window_params = [{transform_indices = @transform_0, window_bounds = array<i64: 1, 4, 256>}, {pipeline_mode = #tpu.pipeline_mode<synchronous>, transform_indices = @transform_1, window_bounds = array<i64: 4, 1>}, {pipeline_mode = #tpu.pipeline_mode<synchronous>, transform_indices = @transform_2, window_bounds = array<i64: 4, 1>}, {pipeline_mode = #tpu.pipeline_mode<synchronous>, transform_indices = @transform_3, window_bounds = array<i64: 4, 4>}, {pipeline_mode = #tpu.pipeline_mode<synchronous>, transform_indices = @transform_4, window_bounds = array<i64: 4, 1>}, {pipeline_mode = #tpu.pipeline_mode<synchronous>, transform_indices = @transform_5, window_bounds = array<i64: 4, 4>}, {pipeline_mode = #tpu.pipeline_mode<synchronous>, transform_indices = @transform_6, window_bounds = array<i64: 4, 1>}, {pipeline_mode = #tpu.pipeline_mode<synchronous>, transform_indices = @transform_7, window_bounds = array<i64: 4, 4>}, {pipeline_mode = #tpu.pipeline_mode<synchronous>, transform_indices = @transform_8, window_bounds = array<i64: 4, 1>}, {pipeline_mode = #tpu.pipeline_mode<synchronous>, transform_indices = @transform_9, window_bounds = array<i64: 4, 1>}, {transform_indices = @transform_10, window_bounds = array<i64: 1, 4, 256>}]} {
    %c0 = arith.constant 0 : index
    %c0_0 = arith.constant 0 : index
    %c0_1 = arith.constant 0 : index
    %0 = vector.load %arg2[%c0, %c0_0, %c0_1] : memref<1x4x256xf32, #tpu.memory_space<vmem>>, vector<1x4x256xf32>
    %1 = vector.shape_cast %0 : vector<1x4x256xf32> to vector<4x256xf32>
    %cst = arith.constant dense<0.000000e+00> : vector<256xf32>
    %2 = vector.multi_reduction <add>, %1, %cst [0] : vector<4x256xf32> to vector<256xf32>
    %3 = vector.shape_cast %2 : vector<256xf32> to vector<1x256xf32>
    %cst_2 = arith.constant 4.000000e+00 : f32
    %4 = vector.broadcast %cst_2 : f32 to vector<1x256xf32>
    %5 = arith.divf %3, %4 : vector<1x256xf32>
    %6 = vector.broadcast %5 : vector<1x256xf32> to vector<4x256xf32>
    %7 = arith.subf %1, %6 : vector<4x256xf32>
    %8 = arith.mulf %7, %7 : vector<4x256xf32>
    %cst_3 = arith.constant dense<0.000000e+00> : vector<256xf32>
    %9 = vector.multi_reduction <add>, %8, %cst_3 [0] : vector<4x256xf32> to vector<256xf32>
    %10 = vector.shape_cast %9 : vector<256xf32> to vector<1x256xf32>
    %cst_4 = arith.constant 4.000000e+00 : f32
    %11 = vector.broadcast %cst_4 : f32 to vector<1x256xf32>
    %12 = arith.divf %10, %11 : vector<1x256xf32>
    %cst_5 = arith.constant 9.99999997E-7 : f32
    %13 = vector.broadcast %cst_5 : f32 to vector<1x256xf32>
    %14 = arith.addf %12, %13 : vector<1x256xf32>
    %15 = math.rsqrt %14 : vector<1x256xf32>
    %16 = vector.broadcast %15 : vector<1x256xf32> to vector<4x256xf32>
    %17 = arith.mulf %7, %16 : vector<4x256xf32>
    %c0_6 = arith.constant 0 : index
    %c0_7 = arith.constant 0 : index
    %18 = vector.load %arg3[%c0_6, %c0_7] : memref<4x1xf32, #tpu.memory_space<vmem>>, vector<4x1xf32>
    %19 = vector.broadcast %18 : vector<4x1xf32> to vector<4x256xf32>
    %20 = arith.mulf %19, %17 : vector<4x256xf32>
    %c0_8 = arith.constant 0 : index
    %c0_9 = arith.constant 0 : index
    %21 = vector.load %arg4[%c0_8, %c0_9] : memref<4x1xf32, #tpu.memory_space<vmem>>, vector<4x1xf32>
    %22 = vector.broadcast %21 : vector<4x1xf32> to vector<4x256xf32>
    %23 = arith.addf %20, %22 : vector<4x256xf32>
    %c0_10 = arith.constant 0 : index
    %c0_11 = arith.constant 0 : index
    %24 = vector.load %arg5[%c0_10, %c0_11] : memref<4x4xf32, #tpu.memory_space<vmem>>, vector<4x4xf32>
    %cst_12 = arith.constant dense<0.000000e+00> : vector<4x256xf32>
    %25 = tpu.matmul %24, %23, %cst_12 {dimension_numbers = #tpu.dot_dimension_numbers<[1], [0], [0], [1], [0, 0, 1, 1], [], []>} : vector<4x4xf32>, vector<4x256xf32>, vector<4x256xf32> -> vector<4x256xf32>
    %c0_13 = arith.constant 0 : index
    %c0_14 = arith.constant 0 : index
    %26 = vector.load %arg6[%c0_13, %c0_14] : memref<4x1xf32, #tpu.memory_space<vmem>>, vector<4x1xf32>
    %27 = vector.broadcast %26 : vector<4x1xf32> to vector<4x256xf32>
    %28 = arith.addf %25, %27 : vector<4x256xf32>
    %c0_15 = arith.constant 0 : index
    %c0_16 = arith.constant 0 : index
    %29 = vector.load %arg7[%c0_15, %c0_16] : memref<4x4xf32, #tpu.memory_space<vmem>>, vector<4x4xf32>
    %cst_17 = arith.constant dense<0.000000e+00> : vector<4x256xf32>
    %30 = tpu.matmul %29, %23, %cst_17 {dimension_numbers = #tpu.dot_dimension_numbers<[1], [0], [0], [1], [0, 0, 1, 1], [], []>} : vector<4x4xf32>, vector<4x256xf32>, vector<4x256xf32> -> vector<4x256xf32>
    %c0_18 = arith.constant 0 : index
    %c0_19 = arith.constant 0 : index
    %31 = vector.load %arg8[%c0_18, %c0_19] : memref<4x1xf32, #tpu.memory_space<vmem>>, vector<4x1xf32>
    %32 = vector.broadcast %31 : vector<4x1xf32> to vector<4x256xf32>
    %33 = arith.addf %30, %32 : vector<4x256xf32>
    %34 = arith.mulf %33, %28 : vector<4x256xf32>
    %c0_20 = arith.constant 0 : index
    %c0_21 = arith.constant 0 : index
    %35 = vector.load %arg9[%c0_20, %c0_21] : memref<4x4xf32, #tpu.memory_space<vmem>>, vector<4x4xf32>
    %cst_22 = arith.constant dense<0.000000e+00> : vector<4x256xf32>
    %36 = tpu.matmul %35, %34, %cst_22 {dimension_numbers = #tpu.dot_dimension_numbers<[1], [0], [0], [1], [0, 0, 1, 1], [], []>} : vector<4x4xf32>, vector<4x256xf32>, vector<4x256xf32> -> vector<4x256xf32>
    %c0_23 = arith.constant 0 : index
    %c0_24 = arith.constant 0 : index
    %37 = vector.load %arg10[%c0_23, %c0_24] : memref<4x1xf32, #tpu.memory_space<vmem>>, vector<4x1xf32>
    %38 = vector.broadcast %37 : vector<4x1xf32> to vector<4x256xf32>
    %39 = arith.addf %36, %38 : vector<4x256xf32>
    %c0_25 = arith.constant 0 : index
    %c0_26 = arith.constant 0 : index
    %40 = vector.load %arg11[%c0_25, %c0_26] : memref<4x1xf32, #tpu.memory_space<vmem>>, vector<4x1xf32>
    %41 = vector.broadcast %40 : vector<4x1xf32> to vector<4x256xf32>
    %42 = arith.mulf %39, %41 : vector<4x256xf32>
    %c0_27 = arith.constant 0 : index
    %c0_28 = arith.constant 0 : index
    %c0_29 = arith.constant 0 : index
    %43 = vector.load %arg2[%c0_27, %c0_28, %c0_29] : memref<1x4x256xf32, #tpu.memory_space<vmem>>, vector<1x4x256xf32>
    %44 = vector.shape_cast %43 : vector<1x4x256xf32> to vector<4x256xf32>
    %45 = arith.addf %42, %44 : vector<4x256xf32>
    %c0_30 = arith.constant 0 : index
    %c0_31 = arith.constant 0 : index
    %c0_32 = arith.constant 0 : index
    %46 = vector.load %arg12[%c0_30, %c0_31, %c0_32] : memref<1x4x256xf32, #tpu.memory_space<vmem>>, vector<1x4x256xf32>
    %47 = vector.shape_cast %46 : vector<1x4x256xf32> to vector<4x256xf32>
    %48 = vector.shape_cast %45 : vector<4x256xf32> to vector<1x4x256xf32>
    tpu.vector_store %arg12[%c0_30, %c0_31, %c0_32], %48 {strides = array<i32>} : memref<1x4x256xf32, #tpu.memory_space<vmem>>, vector<1x4x256xf32>,
    return
  }
  func.func @transform_0(%arg0: i32, %arg1: i32) -> (i32, i32, i32) {
    %c0_i32 = arith.constant 0 : i32
    %c0_i32_0 = arith.constant 0 : i32
    return %arg0, %c0_i32, %arg1 : i32, i32, i32
  }
  func.func @transform_1(%arg0: i32, %arg1: i32) -> (i32, i32) {
    %c0_i32 = arith.constant 0 : i32
    %c0_i32_0 = arith.constant 0 : i32
    %c0_i32_1 = arith.constant 0 : i32
    return %c0_i32, %c0_i32_0 : i32, i32
  }
  func.func @transform_2(%arg0: i32, %arg1: i32) -> (i32, i32) {
    %c0_i32 = arith.constant 0 : i32
    %c0_i32_0 = arith.constant 0 : i32
    %c0_i32_1 = arith.constant 0 : i32
    return %c0_i32, %c0_i32_0 : i32, i32
  }
  func.func @transform_3(%arg0: i32, %arg1: i32) -> (i32, i32) {
    %c0_i32 = arith.constant 0 : i32
    %c0_i32_0 = arith.constant 0 : i32
    %c0_i32_1 = arith.constant 0 : i32
    return %c0_i32, %c0_i32_0 : i32, i32
  }
  func.func @transform_4(%arg0: i32, %arg1: i32) -> (i32, i32) {
    %c0_i32 = arith.constant 0 : i32
    %c0_i32_0 = arith.constant 0 : i32
    %c0_i32_1 = arith.constant 0 : i32
    return %c0_i32, %c0_i32_0 : i32, i32
  }
  func.func @transform_5(%arg0: i32, %arg1: i32) -> (i32, i32) {
    %c0_i32 = arith.constant 0 : i32
    %c0_i32_0 = arith.constant 0 : i32
    %c0_i32_1 = arith.constant 0 : i32
    return %c0_i32, %c0_i32_0 : i32, i32
  }
  func.func @transform_6(%arg0: i32, %arg1: i32) -> (i32, i32) {
    %c0_i32 = arith.constant 0 : i32
    %c0_i32_0 = arith.constant 0 : i32
    %c0_i32_1 = arith.constant 0 : i32
    return %c0_i32, %c0_i32_0 : i32, i32
  }
  func.func @transform_7(%arg0: i32, %arg1: i32) -> (i32, i32) {
    %c0_i32 = arith.constant 0 : i32
    %c0_i32_0 = arith.constant 0 : i32
    %c0_i32_1 = arith.constant 0 : i32
    return %c0_i32, %c0_i32_0 : i32, i32
  }
  func.func @transform_8(%arg0: i32, %arg1: i32) -> (i32, i32) {
    %c0_i32 = arith.constant 0 : i32
    %c0_i32_0 = arith.constant 0 : i32
    %c0_i32_1 = arith.constant 0 : i32
    return %c0_i32, %c0_i32_0 : i32, i32
  }
  func.func @transform_9(%arg0: i32, %arg1: i32) -> (i32, i32) {
    %c0_i32 = arith.constant 0 : i32
    %c0_i32_0 = arith.constant 0 : i32
    %c0_i32_1 = arith.constant 0 : i32
    return %c0_i32, %c0_i32_0 : i32, i32
  }
  func.func @transform_10(%arg0: i32, %arg1: i32) -> (i32, i32, i32) {
    %c0_i32 = arith.constant 0 : i32
    %c0_i32_0 = arith.constant 0 : i32
    return %arg0, %c0_i32, %arg1 : i32, i32, i32
  }
}

</mosaic_0001>

<llo_original>
// kernel: tpu_custom_call.1
$region0: #{tpu_custom_call.1}
  #allocation0 [shape = 'u32[]', space=smem, size = 0x4, offset = 0x4, fixed_abs, tag = 'smem constant byte address 0x4 - core index']
  #allocation1 [shape = 'u32[144,128]{1,0:T(1,128)}', space=vmem, size = 0x12000, scoped, tag = 'internal scratch']
  %s0 = inlined_call_operand.vmem [shape: f32[2,4,256], index: 0, kind: input, shape index: {}]
  %s1 = inlined_call_operand.vmem [shape: f32[4,1], index: 1, kind: input, shape index: {}]
  %s2 = inlined_call_operand.vmem [shape: f32[4,1], index: 2, kind: input, shape index: {}]
  %s3 = inlined_call_operand.vmem [shape: f32[4,4], index: 3, kind: input, shape index: {}]
  %s4 = inlined_call_operand.vmem [shape: f32[4,1], index: 4, kind: input, shape index: {}]
  %s5 = inlined_call_operand.vmem [shape: f32[4,4], index: 5, kind: input, shape index: {}]
  %s6 = inlined_call_operand.vmem [shape: f32[4,1], index: 6, kind: input, shape index: {}]
  %s7 = inlined_call_operand.vmem [shape: f32[4,4], index: 7, kind: input, shape index: {}]
  %s8 = inlined_call_operand.vmem [shape: f32[4,1], index: 8, kind: input, shape index: {}]
  %s9 = inlined_call_operand.vmem [shape: f32[4,1], index: 9, kind: input, shape index: {}]
  %s10 = inlined_call_operand.hbm [shape: f32[2,4,256], index: 10, kind: output, shape index: {}]
  %s11 = sld [smem:[#allocation0]]
  $region73: #{tpu_custom_call.1} parent=0
    _
  %s13 = ssub.s32 1, %s11
  %s14 = scalar_select 0, %s13, %s11
  $region1: #{tpu_custom_call.1} parent=0
    #allocation2 [shape = 'u8[8192]{0}', space=vmem, size = 0x2000, scoped, tag = 'output window, operand 0']
    #allocation3 [shape = 's32[2]{0}', space=sflag, size = 0x8, scoped, tag = 'scoped memory for tpu_custom_call.1']
    %15 = vsyncpa [#allocation3], 0
    %s16 = scalar_lea.sflag [#allocation3], 1
    %17 = vsyncpa %s16, 0
    loop: start=0, step=1, limit=4
    $region2: #{tpu_custom_call.1} parent=1 // loop_pre_header
      _
    $region3: #{tpu_custom_call.1} parent=1 // loop_header
      %s19 = sphi 0, %s23
      %p20 = scmp.ge.s32.totalorder %s19, 4
      %s26 = sphi 0, %s38
      %s27 = sphi 0, %s34
      %s28 = sphi 0, %s26
      %s29 = sphi 0, %s27
      %s30 = sphi 0, %s28
      %s31 = sphi 0, %s29
      %s43 = sphi 0, %s45
      %s46 = sphi 0, %s43
      %s47 = sphi 0, %s46
      %s63 = sphi 0, %s47
      %s67 = sphi 0, %s67
      %s69 = sphi 0, %s67
      %s70 = sphi 0, %s69
      %s84 = sphi 0, %s70
      %s88 = sphi 0, %s88
      %s90 = sphi 0, %s88
      %s91 = sphi 0, %s90
      %s105 = sphi 0, %s91
      %s109 = sphi 0, %s109
      %s111 = sphi 0, %s109
      %s112 = sphi 0, %s111
      %s126 = sphi 0, %s112
      %s130 = sphi 0, %s130
      %s132 = sphi 0, %s130
      %s133 = sphi 0, %s132
      %s147 = sphi 0, %s133
      %s151 = sphi 0, %s151
      %s153 = sphi 0, %s151
      %s154 = sphi 0, %s153
      %s168 = sphi 0, %s154
      %s172 = sphi 0, %s172
      %s174 = sphi 0, %s172
      %s175 = sphi 0, %s174
      %s189 = sphi 0, %s175
      %s193 = sphi 0, %s193
      %s195 = sphi 0, %s193
      %s196 = sphi 0, %s195
      %s210 = sphi 0, %s196
      %s214 = sphi 0, %s214
      %s216 = sphi 0, %s214
      %s217 = sphi 0, %s216
      %s231 = sphi 0, %s217
      %s235 = sphi 0, %s235
      %s237 = sphi 0, %s235
      %s238 = sphi 0, %s237
      %s252 = sphi 0, %s238
      %s260 = sphi 0, %s262
      %s263 = sphi 0, %s260
      %s264 = sphi 0, %s263
      %s280 = sphi 0, %s264
    $region4: #{tpu_custom_call.1} parent=1 // loop_header_branch
      %22 = sbr.rel (%p20) target = $region8
    $region5: #{tpu_custom_call.1} parent=1 // loop_body
      %s24 = ssub.s32 %s19, 1
      %s25 = ssub.s32 %s19, 2
      %s32 = sadd.s32 1, %s27
      %p33 = scmp.ge.s32.totalorder %s32, 1
      %s34 = scalar_select %p33, 0, %s32
      %s35 = sadd.s32 1, %s26
      %s36 = scalar_select %p33, %s35, %s26
      %p37 = scmp.ge.s32.totalorder %s36, 2
      %s38 = scalar_select %p37, 0, %s36
      %s39 = ssub.s32 %s26, %s38
      %s40 = ssub.s32 %s27, %s34
      %s41 = sor.u32 %s39, %s40
      %p42 = scmp.eq.s32.totalorder %s41, 0
      %s44 = sadd.s32 %s43, 1
      %s45 = scalar_select %p42, %s43, %s44
      %p48 = pneg %p42
      %p49 = scmp.eq.s32.totalorder %s19, 1
      %p50 = por %p48, %p49
      %p51 = scmp.ne.s32.totalorder %s43, %s46
      %p52 = scmp.eq.s32.totalorder %s19, 0
      %p53 = por %p51, %p52
      %p54 = scmp.ne.s32.totalorder %s43, %s46
      %p55 = scmp.eq.s32.totalorder %s24, 1
      %p56 = por %p54, %p55
      %p57 = scmp.ne.s32.totalorder %s46, %s47
      %p58 = scmp.eq.s32.totalorder %s24, 0
      %p59 = por %p57, %p58
      %p60 = scmp.ne.s32.totalorder %s46, %s47
      %p61 = scmp.eq.s32.totalorder %s25, 1
      %p62 = por %p60, %p61
      %p64 = scmp.ne.s32.totalorder %s47, %s63
      %p65 = scmp.eq.s32.totalorder %s25, 0
      %p66 = por %p64, %p65
      %s68 = sadd.s32 %s67, 1
      %p71 = scmp.eq.s32.totalorder %s19, 1
      %p72 = scmp.ne.s32.totalorder %s67, %s69
      %p73 = scmp.eq.s32.totalorder %s19, 0
      %p74 = por %p72, %p73
      %p75 = scmp.ne.s32.totalorder %s67, %s69
      %p76 = scmp.eq.s32.totalorder %s24, 1
      %p77 = por %p75, %p76
      %p78 = scmp.ne.s32.totalorder %s69, %s70
      %p79 = scmp.eq.s32.totalorder %s24, 0
      %p80 = por %p78, %p79
      %p81 = scmp.ne.s32.totalorder %s69, %s70
      %p82 = scmp.eq.s32.totalorder %s25, 1
      %p83 = por %p81, %p82
      %p85 = scmp.ne.s32.totalorder %s70, %s84
      %p86 = scmp.eq.s32.totalorder %s25, 0
      %p87 = por %p85, %p86
      %s89 = sadd.s32 %s88, 1
      %p92 = scmp.eq.s32.totalorder %s19, 1
      %p93 = scmp.ne.s32.totalorder %s88, %s90
      %p94 = scmp.eq.s32.totalorder %s19, 0
      %p95 = por %p93, %p94
      %p96 = scmp.ne.s32.totalorder %s88, %s90
      %p97 = scmp.eq.s32.totalorder %s24, 1
      %p98 = por %p96, %p97
      %p99 = scmp.ne.s32.totalorder %s90, %s91
      %p100 = scmp.eq.s32.totalorder %s24, 0
      %p101 = por %p99, %p100
      %p102 = scmp.ne.s32.totalorder %s90, %s91
      %p103 = scmp.eq.s32.totalorder %s25, 1
      %p104 = por %p102, %p103
      %p106 = scmp.ne.s32.totalorder %s91, %s105
      %p107 = scmp.eq.s32.totalorder %s25, 0
      %p108 = por %p106, %p107
      %s110 = sadd.s32 %s109, 1
      %p113 = scmp.eq.s32.totalorder %s19, 1
      %p114 = scmp.ne.s32.totalorder %s109, %s111
      %p115 = scmp.eq.s32.totalorder %s19, 0
      %p116 = por %p114, %p115
      %p117 = scmp.ne.s32.totalorder %s109, %s111
      %p118 = scmp.eq.s32.totalorder %s24, 1
      %p119 = por %p117, %p118
      %p120 = scmp.ne.s32.totalorder %s111, %s112
      %p121 = scmp.eq.s32.totalorder %s24, 0
      %p122 = por %p120, %p121
      %p123 = scmp.ne.s32.totalorder %s111, %s112
      %p124 = scmp.eq.s32.totalorder %s25, 1
      %p125 = por %p123, %p124
      %p127 = scmp.ne.s32.totalorder %s112, %s126
      %p128 = scmp.eq.s32.totalorder %s25, 0
      %p129 = por %p127, %p128
      %s131 = sadd.s32 %s130, 1
      %p134 = scmp.eq.s32.totalorder %s19, 1
      %p135 = scmp.ne.s32.totalorder %s130, %s132
      %p136 = scmp.eq.s32.totalorder %s19, 0
      %p137 = por %p135, %p136
      %p138 = scmp.ne.s32.totalorder %s130, %s132
      %p139 = scmp.eq.s32.totalorder %s24, 1
      %p140 = por %p138, %p139
      %p141 = scmp.ne.s32.totalorder %s132, %s133
      %p142 = scmp.eq.s32.totalorder %s24, 0
      %p143 = por %p141, %p142
      %p144 = scmp.ne.s32.totalorder %s132, %s133
      %p145 = scmp.eq.s32.totalorder %s25, 1
      %p146 = por %p144, %p145
      %p148 = scmp.ne.s32.totalorder %s133, %s147
      %p149 = scmp.eq.s32.totalorder %s25, 0
      %p150 = por %p148, %p149
      %s152 = sadd.s32 %s151, 1
      %p155 = scmp.eq.s32.totalorder %s19, 1
      %p156 = scmp.ne.s32.totalorder %s151, %s153
      %p157 = scmp.eq.s32.totalorder %s19, 0
      %p158 = por %p156, %p157
      %p159 = scmp.ne.s32.totalorder %s151, %s153
      %p160 = scmp.eq.s32.totalorder %s24, 1
      %p161 = por %p159, %p160
      %p162 = scmp.ne.s32.totalorder %s153, %s154
      %p163 = scmp.eq.s32.totalorder %s24, 0
      %p164 = por %p162, %p163
      %p165 = scmp.ne.s32.totalorder %s153, %s154
      %p166 = scmp.eq.s32.totalorder %s25, 1
      %p167 = por %p165, %p166
      %p169 = scmp.ne.s32.totalorder %s154, %s168
      %p170 = scmp.eq.s32.totalorder %s25, 0
      %p171 = por %p169, %p170
      %s173 = sadd.s32 %s172, 1
      %p176 = scmp.eq.s32.totalorder %s19, 1
      %p177 = scmp.ne.s32.totalorder %s172, %s174
      %p178 = scmp.eq.s32.totalorder %s19, 0
      %p179 = por %p177, %p178
      %p180 = scmp.ne.s32.totalorder %s172, %s174
      %p181 = scmp.eq.s32.totalorder %s24, 1
      %p182 = por %p180, %p181
      %p183 = scmp.ne.s32.totalorder %s174, %s175
      %p184 = scmp.eq.s32.totalorder %s24, 0
      %p185 = por %p183, %p184
      %p186 = scmp.ne.s32.totalorder %s174, %s175
      %p187 = scmp.eq.s32.totalorder %s25, 1
      %p188 = por %p186, %p187
      %p190 = scmp.ne.s32.totalorder %s175, %s189
      %p191 = scmp.eq.s32.totalorder %s25, 0
      %p192 = por %p190, %p191
      %s194 = sadd.s32 %s193, 1
      %p197 = scmp.eq.s32.totalorder %s19, 1
      %p198 = scmp.ne.s32.totalorder %s193, %s195
      %p199 = scmp.eq.s32.totalorder %s19, 0
      %p200 = por %p198, %p199
      %p201 = scmp.ne.s32.totalorder %s193, %s195
      %p202 = scmp.eq.s32.totalorder %s24, 1
      %p203 = por %p201, %p202
      %p204 = scmp.ne.s32.totalorder %s195, %s196
      %p205 = scmp.eq.s32.totalorder %s24, 0
      %p206 = por %p204, %p205
      %p207 = scmp.ne.s32.totalorder %s195, %s196
      %p208 = scmp.eq.s32.totalorder %s25, 1
      %p209 = por %p207, %p208
      %p211 = scmp.ne.s32.totalorder %s196, %s210
      %p212 = scmp.eq.s32.totalorder %s25, 0
      %p213 = por %p211, %p212
      %s215 = sadd.s32 %s214, 1
      %p218 = scmp.eq.s32.totalorder %s19, 1
      %p219 = scmp.ne.s32.totalorder %s214, %s216
      %p220 = scmp.eq.s32.totalorder %s19, 0
      %p221 = por %p219, %p220
      %p222 = scmp.ne.s32.totalorder %s214, %s216
      %p223 = scmp.eq.s32.totalorder %s24, 1
      %p224 = por %p222, %p223
      %p225 = scmp.ne.s32.totalorder %s216, %s217
      %p226 = scmp.eq.s32.totalorder %s24, 0
      %p227 = por %p225, %p226
      %p228 = scmp.ne.s32.totalorder %s216, %s217
      %p229 = scmp.eq.s32.totalorder %s25, 1
      %p230 = por %p228, %p229
      %p232 = scmp.ne.s32.totalorder %s217, %s231
      %p233 = scmp.eq.s32.totalorder %s25, 0
      %p234 = por %p232, %p233
      %s236 = sadd.s32 %s235, 1
      %p239 = scmp.eq.s32.totalorder %s19, 1
      %p240 = scmp.ne.s32.totalorder %s235, %s237
      %p241 = scmp.eq.s32.totalorder %s19, 0
      %p242 = por %p240, %p241
      %p243 = scmp.ne.s32.totalorder %s235, %s237
      %p244 = scmp.eq.s32.totalorder %s24, 1
      %p245 = por %p243, %p244
      %p246 = scmp.ne.s32.totalorder %s237, %s238
      %p247 = scmp.eq.s32.totalorder %s24, 0
      %p248 = por %p246, %p247
      %p249 = scmp.ne.s32.totalorder %s237, %s238
      %p250 = scmp.eq.s32.totalorder %s25, 1
      %p251 = por %p249, %p250
      %p253 = scmp.ne.s32.totalorder %s238, %s252
      %p254 = scmp.eq.s32.totalorder %s25, 0
      %p255 = por %p253, %p254
      %s256 = ssub.s32 %s26, %s38
      %s257 = ssub.s32 %s27, %s34
      %s258 = sor.u32 %s256, %s257
      %p259 = scmp.eq.s32.totalorder %s258, 0
      %s261 = sadd.s32 %s260, 1
      %s262 = scalar_select %p259, %s260, %s261
      %p265 = pneg %p259
      %p266 = scmp.eq.s32.totalorder %s19, 1
      %p267 = por %p265, %p266
      %p268 = scmp.ne.s32.totalorder %s260, %s263
      %p269 = scmp.eq.s32.totalorder %s19, 0
      %p270 = por %p268, %p269
      %p271 = scmp.ne.s32.totalorder %s260, %s263
      %p272 = scmp.eq.s32.totalorder %s24, 1
      %p273 = por %p271, %p272
      %p274 = scmp.ne.s32.totalorder %s263, %s264
      %p275 = scmp.eq.s32.totalorder %s24, 0
      %p276 = por %p274, %p275
      %p277 = scmp.ne.s32.totalorder %s263, %s264
      %p278 = scmp.eq.s32.totalorder %s25, 1
      %p279 = por %p277, %p278
      %p281 = scmp.ne.s32.totalorder %s264, %s280
      %p282 = scmp.eq.s32.totalorder %s25, 0
      %p283 = por %p281, %p282
      %p284 = scmp.le.s32.totalorder 1, %s19
      %p285 = scmp.lt.s32.totalorder %s19, 3
      %p286 = pnand %p284, %p285
      %p287 = pneg %p286
      // Predicated region
      $region9: #{tpu_custom_call.1} parent=5 // pred_check
        _
      $region10: #{tpu_custom_call.1} parent=5 // pred_check_branch
        %289 = sbr.rel (%p286) target = $region12
      $region11: #{tpu_custom_call.1} parent=5 // pred_region
        %s290 = ssub.s32 %s19, 1
        // Predicated region
        $region13: #{tpu_custom_call.1} parent=11 // pred_check
          %p291 = pneg %p80
        $region14: #{tpu_custom_call.1} parent=11 // pred_check_branch
          %293 = sbr.rel (%p291) target = $region16
        $region15: #{tpu_custom_call.1} parent=11 // pred_region
          _
        $region16: #{tpu_custom_call.1} parent=11 // pred_fallthru
          _
        // Predicated region
        $region17: #{tpu_custom_call.1} parent=11 // pred_check
          %p294 = pneg %p101
        $region18: #{tpu_custom_call.1} parent=11 // pred_check_branch
          %296 = sbr.rel (%p294) target = $region20
        $region19: #{tpu_custom_call.1} parent=11 // pred_region
          _
        $region20: #{tpu_custom_call.1} parent=11 // pred_fallthru
          _
        // Predicated region
        $region21: #{tpu_custom_call.1} parent=11 // pred_check
          %p297 = pneg %p122
        $region22: #{tpu_custom_call.1} parent=11 // pred_check_branch
          %299 = sbr.rel (%p297) target = $region24
        $region23: #{tpu_custom_call.1} parent=11 // pred_region
          _
        $region24: #{tpu_custom_call.1} parent=11 // pred_fallthru
          _
        // Predicated region
        $region25: #{tpu_custom_call.1} parent=11 // pred_check
          %p300 = pneg %p143
        $region26: #{tpu_custom_call.1} parent=11 // pred_check_branch
          %302 = sbr.rel (%p300) target = $region28
        $region27: #{tpu_custom_call.1} parent=11 // pred_region
          _
        $region28: #{tpu_custom_call.1} parent=11 // pred_fallthru
          _
        // Predicated region
        $region29: #{tpu_custom_call.1} parent=11 // pred_check
          %p303 = pneg %p164
        $region30: #{tpu_custom_call.1} parent=11 // pred_check_branch
          %305 = sbr.rel (%p303) target = $region32
        $region31: #{tpu_custom_call.1} parent=11 // pred_region
          _
        $region32: #{tpu_custom_call.1} parent=11 // pred_fallthru
          _
        // Predicated region
        $region33: #{tpu_custom_call.1} parent=11 // pred_check
          %p306 = pneg %p185
        $region34: #{tpu_custom_call.1} parent=11 // pred_check_branch
          %308 = sbr.rel (%p306) target = $region36
        $region35: #{tpu_custom_call.1} parent=11 // pred_region
          _
        $region36: #{tpu_custom_call.1} parent=11 // pred_fallthru
          _
        // Predicated region
        $region37: #{tpu_custom_call.1} parent=11 // pred_check
          %p309 = pneg %p206
        $region38: #{tpu_custom_call.1} parent=11 // pred_check_branch
          %311 = sbr.rel (%p309) target = $region40
        $region39: #{tpu_custom_call.1} parent=11 // pred_region
          _
        $region40: #{tpu_custom_call.1} parent=11 // pred_fallthru
          _
        // Predicated region
        $region41: #{tpu_custom_call.1} parent=11 // pred_check
          %p312 = pneg %p227
        $region42: #{tpu_custom_call.1} parent=11 // pred_check_branch
          %314 = sbr.rel (%p312) target = $region44
        $region43: #{tpu_custom_call.1} parent=11 // pred_region
          _
        $region44: #{tpu_custom_call.1} parent=11 // pred_fallthru
          _
        // Predicated region
        $region45: #{tpu_custom_call.1} parent=11 // pred_check
          %p315 = pneg %p248
        $region46: #{tpu_custom_call.1} parent=11 // pred_check_branch
          %317 = sbr.rel (%p315) target = $region48
        $region47: #{tpu_custom_call.1} parent=11 // pred_region
          _
        $region48: #{tpu_custom_call.1} parent=11 // pred_fallthru
          _
      $region12: #{tpu_custom_call.1} parent=5 // pred_fallthru
        _
      %p318 = scmp.lt.s32.totalorder %s19, 2
      // Predicated region
      $region49: #{tpu_custom_call.1} parent=5 // pred_check
        %p319 = pneg %p318
      $region50: #{tpu_custom_call.1} parent=5 // pred_check_branch
        %321 = sbr.rel (%p319) target = $region52
      $region51: #{tpu_custom_call.1} parent=5 // pred_region
        // Predicated region
        $region53: #{tpu_custom_call.1} parent=51 // pred_check
          %p322 = pneg %p53
        $region54: #{tpu_custom_call.1} parent=51 // pred_check_branch
          %324 = sbr.rel (%p322) target = $region56
        $region55: #{tpu_custom_call.1} parent=51 // pred_region
          %s325 = smul.u32 2, %s27
          %p326 = scmp.lt.s32.totalorder %s26, 1
          %s327 = scalar_select %p326, %s26, 1
          %p328 = scmp.lt.s32.totalorder %s325, 1
          %s329 = scalar_select %p328, %s325, 1
          %s330 = smul.addr %s327, 2
          %s331 = sadd.s32 %s329, %s330
          %s332 = smul.addr %s331, 4
          %s333 = scalar_lea.vmem %s0, %s332
          %s334 = smul.u32 2, %s27
        $region56: #{tpu_custom_call.1} parent=51 // pred_fallthru
          _
      $region52: #{tpu_custom_call.1} parent=5 // pred_fallthru
        _
      %p335 = scmp.le.s32.totalorder 1, %s19
      %p336 = scmp.lt.s32.totalorder %s19, 3
      %p337 = pnand %p335, %p336
      %p338 = pneg %p337
      // Predicated region
      $region57: #{tpu_custom_call.1} parent=5 // pred_check
        _
      $region58: #{tpu_custom_call.1} parent=5 // pred_check_branch
        %340 = sbr.rel (%p337) target = $region60
      $region59: #{tpu_custom_call.1} parent=5 // pred_region
        %s341 = ssub.s32 %s19, 1
        %s342 = smul.u32 2, %s29
        %p343 = scmp.lt.s32.totalorder %s28, 1
        %s344 = scalar_select %p343, %s28, 1
        %p345 = scmp.lt.s32.totalorder %s342, 1
        %s346 = scalar_select %p345, %s342, 1
        %s347 = smul.addr %s344, 2
        %s348 = sadd.s32 %s346, %s347
        %s349 = smul.addr %s348, 4
        %s350 = scalar_lea.vmem %s0, %s349
        %p351 = pneg %p59
        %p352 = pneg %p56
        %p353 = pneg %p80
        %p354 = pneg %p77
        %p355 = pneg %p101
        %p356 = pneg %p98
        %p357 = pneg %p122
        %p358 = pneg %p119
        %p359 = pneg %p143
        %p360 = pneg %p140
        %p361 = pneg %p164
        %p362 = pneg %p161
        %p363 = pneg %p185
        %p364 = pneg %p182
        %p365 = pneg %p206
        %p366 = pneg %p203
        %p367 = pneg %p227
        %p368 = pneg %p224
        %p369 = pneg %p248
        %p370 = pneg %p245
        %p371 = pneg %p276
        %p372 = pneg %p273
        %s373 = sand.u32 %s263, 1
        %s374 = scalar_lea.sflag [#allocation3], %s373
        %s375 = sand.u32 %s263, 1
        %s376 = smul.addr %s375, 8
        %s377 = scalar_lea.vmem [#allocation2], %s376
        %s378 = smul.u32 2, %s29
        %p379 = scmp.lt.s32.totalorder %s28, 1
        %s380 = scalar_select %p379, %s28, 1
        %p381 = scmp.lt.s32.totalorder %s378, 1
        %s382 = scalar_select %p381, %s378, 1
        %s383 = smul.addr %s380, 2
        %s384 = sadd.s32 %s382, %s383
        %s385 = smul.addr %s384, 4
        %s386 = scalar_lea.vmem %s0, %s385
        %s387 = smul.u32 2, %s29
        %s388 = smul.u32 2, %s29
        %v389 = vld [vmem:[%s386] sm:$0xff]
        %v391 = vcombine.high %v389, %v389
        %vm393 = vcmask 1043456
        %v394 = vsel %vm393, %v389, 0.0
        %v395 = vrot.slane %v394, 4
        %v396 = vadd.f32 %v394, %v395
        %v397 = vrot.slane %v396, 2
        %v398 = vadd.f32 %v396, %v397
        %v399 = vrot.slane %v398, 1
        %v400 = vadd.f32 %v398, %v399
        %v401 = vsel %vm393, %v391, 0.0
        %v402 = vrot.slane %v401, 4
        %v403 = vadd.f32 %v401, %v402
        %v404 = vrot.slane %v403, 2
        %v405 = vadd.f32 %v403, %v404
        %v406 = vrot.slane %v405, 1
        %v407 = vadd.f32 %v405, %v406
        %v408 = vrcp.pop 4.0
        %v409 = vmul.f32 %v400, %v408
        %v410 = vmul.f32 %v407, %v408
        %v413 = vcombine.low %v409, %v410
        %v415 = vsub.f32 %v389, %v413
        %v416 = vmul.f32 %v415, %v415
        %v418 = vcombine.high %v416, %v416
        %v420 = vsel %vm393, %v416, 0.0
        %v421 = vrot.slane %v420, 4
        %v422 = vadd.f32 %v420, %v421
        %v423 = vrot.slane %v422, 2
        %v424 = vadd.f32 %v422, %v423
        %v425 = vrot.slane %v424, 1
        %v426 = vadd.f32 %v424, %v425
        %v427 = vsel %vm393, %v418, 0.0
        %v428 = vrot.slane %v427, 4
        %v429 = vadd.f32 %v427, %v428
        %v430 = vrot.slane %v429, 2
        %v431 = vadd.f32 %v429, %v430
        %v432 = vrot.slane %v431, 1
        %v433 = vadd.f32 %v431, %v432
        %v434 = vmul.f32 %v426, %v408
        %v435 = vmul.f32 %v433, %v408
        %v436 = vadd.f32 %v434, 1e-06
        %v437 = vadd.f32 %v435, 1e-06
        %v438 = vrsqrt.pop %v436
        %v439 = vrsqrt.pop %v437
        %v442 = vcombine.low %v438, %v439
        %v444 = vmul.f32 %v415, %v442
        %v445 = vld [vmem:[%s1] sm:$0xf]
        %447 = vset.pattern.permute.xlu0 0
        %448 = vperm.xlu0 %447, %v445
        %v449 = vpop.permute.xlu0 %448
        %v452 = vcombine.high %v444, %v444
        %v454 = vmul.f32 %v449, %v444
        %v455 = vmul.f32 %v449, %v452
        %v456 = vld [vmem:[%s2] sm:$0xf]
        %458 = vset.pattern.permute.xlu0 0
        %459 = vperm.xlu0 %458, %v456
        %v460 = vpop.permute.xlu0 %459
        %v462 = vadd.f32 %v454, %v460
        %v463 = vadd.f32 %v455, %v460
        %v464 = vld [vmem:[%s3] sm:$0xf]
        %v465 = vld [vmem:[%s4] sm:$0xf]
        %467 = vset.pattern.permute.xlu0 0
        %468 = vperm.xlu0 %467, %v465
        %v469 = vpop.permute.xlu0 %468
        %vm471 = vcmask 31744
        %v473 = vsel %vm471, %v464, 0
        %v476 = vsel %vm393, %v462, 0
        %v479 = vsel %vm393, %v463, 0
        %481 = vmatprep.subr.mxu0 0.0
        %482 = vmatpush1.msra.mxu0 0.0
        %483 = vmatprep.subr.mxu0 0.0
        %484 = vmatpush1.msra.mxu0 0.0
        %485 = vmatprep.subr.mxu0 0.0
        %486 = vmatpush1.msra.mxu0 0.0
        %487 = vmatprep.subr.mxu0 0.0
        %488 = vmatpush1.msra.mxu0 0.0
        %489 = vmatprep.subr.mxu0 0.0
        %490 = vmatpush1.msra.mxu0 0.0
        %491 = vmatprep.subr.mxu0 0.0
        %492 = vmatpush1.msra.mxu0 0.0
        %493 = vmatprep.subr.mxu0 0.0
        %494 = vmatpush1.msra.mxu0 0.0
        %495 = vmatprep.subr.mxu0 0.0
        %496 = vmatpush1.msra.mxu0 0.0
        %497 = vmatprep.subr.mxu0 0.0
        %498 = vmatpush1.msra.mxu0 0.0
        %499 = vmatprep.subr.mxu0 0.0
        %500 = vmatpush1.msra.mxu0 0.0
        %501 = vmatprep.subr.mxu0 0.0
        %502 = vmatpush1.msra.mxu0 0.0
        %503 = vmatprep.subr.mxu0 0.0
        %504 = vmatpush1.msra.mxu0 0.0
        %505 = vmatprep.subr.mxu0 0.0
        %506 = vmatpush1.msra.mxu0 0.0
        %507 = vmatprep.subr.mxu0 0.0
        %508 = vmatpush1.msra.mxu0 0.0
        %509 = vmatprep.subr.mxu0 0.0
        %510 = vmatpush1.msra.mxu0 0.0
        %511 = vmatprep.subr.mxu0 %v479
        %512 = vmatpush1.msra.mxu0 %v476
        %513 = vmatprep.subr.mxu0 0.0
        %514 = vmatpush2.msra.mxu0 0.0
        %515 = vmatprep.subr.mxu0 0.0
        %516 = vmatpush2.msra.mxu0 0.0
        %517 = vmatprep.subr.mxu0 0.0
        %518 = vmatpush2.msra.mxu0 0.0
        %519 = vmatprep.subr.mxu0 0.0
        %520 = vmatpush2.msra.mxu0 0.0
        %521 = vmatprep.subr.mxu0 0.0
        %522 = vmatpush2.msra.mxu0 0.0
        %523 = vmatprep.subr.mxu0 0.0
        %524 = vmatpush2.msra.mxu0 0.0
        %525 = vmatprep.subr.mxu0 0.0
        %526 = vmatpush2.msra.mxu0 0.0
        %527 = vmatprep.subr.mxu0 0.0
        %528 = vmatpush2.msra.mxu0 0.0
        %529 = vmatprep.subr.mxu0 0.0
        %530 = vmatpush2.msra.mxu0 0.0
        %531 = vmatprep.subr.mxu0 0.0
        %532 = vmatpush2.msra.mxu0 0.0
        %533 = vmatprep.subr.mxu0 0.0
        %534 = vmatpush2.msra.mxu0 0.0
        %535 = vmatprep.subr.mxu0 0.0
        %536 = vmatpush2.msra.mxu0 0.0
        %537 = vmatprep.subr.mxu0 0.0
        %538 = vmatpush2.msra.mxu0 0.0
        %539 = vmatprep.subr.mxu0 0.0
        %540 = vmatpush2.msra.mxu0 0.0
        %541 = vmatprep.subr.mxu0 0.0
        %542 = vmatpush2.msra.mxu0 0.0
        %543 = vmatprep.subr.mxu0 0.0
        %544 = vmatpush2.msra.mxu0 0.0
        %545 = vmatprep.mubr.f32.mxu0 0.0
        %546 = vmatmul.mubr.f32.gmra.mxu0 %v473
        %v547 = vpop.f32.mrf.mxu0
        %v548 = vadd.f32 %v469, %v547
        %v549 = vpop.f32.mrf.mxu0
        %v550 = vadd.f32 %v469, %v549
        %551 = vdwg.mxu0
        %v552 = vld [vmem:[%s5] sm:$0xf]
        %v553 = vld [vmem:[%s6] sm:$0xf]
        %555 = vset.pattern.permute.xlu0 0
        %556 = vperm.xlu0 %555, %v553
        %v557 = vpop.permute.xlu0 %556
        %v560 = vsel %vm471, %v552, 0
        %562 = vmatprep.subr.mxu0 0.0
        %563 = vmatpush1.msra.mxu0 0.0
        %564 = vmatprep.subr.mxu0 0.0
        %565 = vmatpush1.msra.mxu0 0.0
        %566 = vmatprep.subr.mxu0 0.0
        %567 = vmatpush1.msra.mxu0 0.0
        %568 = vmatprep.subr.mxu0 0.0
        %569 = vmatpush1.msra.mxu0 0.0
        %570 = vmatprep.subr.mxu0 0.0
        %571 = vmatpush1.msra.mxu0 0.0
        %572 = vmatprep.subr.mxu0 0.0
        %573 = vmatpush1.msra.mxu0 0.0
        %574 = vmatprep.subr.mxu0 0.0
        %575 = vmatpush1.msra.mxu0 0.0
        %576 = vmatprep.subr.mxu0 0.0
        %577 = vmatpush1.msra.mxu0 0.0
        %578 = vmatprep.subr.mxu0 0.0
        %579 = vmatpush1.msra.mxu0 0.0
        %580 = vmatprep.subr.mxu0 0.0
        %581 = vmatpush1.msra.mxu0 0.0
        %582 = vmatprep.subr.mxu0 0.0
        %583 = vmatpush1.msra.mxu0 0.0
        %584 = vmatprep.subr.mxu0 0.0
        %585 = vmatpush1.msra.mxu0 0.0
        %586 = vmatprep.subr.mxu0 0.0
        %587 = vmatpush1.msra.mxu0 0.0
        %588 = vmatprep.subr.mxu0 0.0
        %589 = vmatpush1.msra.mxu0 0.0
        %590 = vmatprep.subr.mxu0 0.0
        %591 = vmatpush1.msra.mxu0 0.0
        %592 = vmatprep.subr.mxu0 %v479
        %593 = vmatpush1.msra.mxu0 %v476
        %594 = vmatprep.subr.mxu0 0.0
        %595 = vmatpush2.msra.mxu0 0.0
        %596 = vmatprep.subr.mxu0 0.0
        %597 = vmatpush2.msra.mxu0 0.0
        %598 = vmatprep.subr.mxu0 0.0
        %599 = vmatpush2.msra.mxu0 0.0
        %600 = vmatprep.subr.mxu0 0.0
        %601 = vmatpush2.msra.mxu0 0.0
        %602 = vmatprep.subr.mxu0 0.0
        %603 = vmatpush2.msra.mxu0 0.0
        %604 = vmatprep.subr.mxu0 0.0
        %605 = vmatpush2.msra.mxu0 0.0
        %606 = vmatprep.subr.mxu0 0.0
        %607 = vmatpush2.msra.mxu0 0.0
        %608 = vmatprep.subr.mxu0 0.0
        %609 = vmatpush2.msra.mxu0 0.0
        %610 = vmatprep.subr.mxu0 0.0
        %611 = vmatpush2.msra.mxu0 0.0
        %612 = vmatprep.subr.mxu0 0.0
        %613 = vmatpush2.msra.mxu0 0.0
        %614 = vmatprep.subr.mxu0 0.0
        %615 = vmatpush2.msra.mxu0 0.0
        %616 = vmatprep.subr.mxu0 0.0
        %617 = vmatpush2.msra.mxu0 0.0
        %618 = vmatprep.subr.mxu0 0.0
        %619 = vmatpush2.msra.mxu0 0.0
        %620 = vmatprep.subr.mxu0 0.0
        %621 = vmatpush2.msra.mxu0 0.0
        %622 = vmatprep.subr.mxu0 0.0
        %623 = vmatpush2.msra.mxu0 0.0
        %624 = vmatprep.subr.mxu0 0.0
        %625 = vmatpush2.msra.mxu0 0.0
        %626 = vmatprep.mubr.f32.mxu0 0.0
        %627 = vmatmul.mubr.f32.gmra.mxu0 %v560
        %v628 = vpop.f32.mrf.mxu0
        %v629 = vadd.f32 %v557, %v628
        %v630 = vpop.f32.mrf.mxu0
        %v631 = vadd.f32 %v557, %v630
        %632 = vdwg.mxu0
        %v633 = vmul.f32 %v629, %v548
        %v634 = vmul.f32 %v631, %v550
        %v635 = vld [vmem:[%s7] sm:$0xf]
        %v636 = vld [vmem:[%s8] sm:$0xf]
        %638 = vset.pattern.permute.xlu0 0
        %639 = vperm.xlu0 %638, %v636
        %v640 = vpop.permute.xlu0 %639
        %v643 = vsel %vm471, %v635, 0
        %v646 = vsel %vm393, %v633, 0
        %v649 = vsel %vm393, %v634, 0
        %651 = vmatprep.subr.mxu0 0.0
        %652 = vmatpush1.msra.mxu0 0.0
        %653 = vmatprep.subr.mxu0 0.0
        %654 = vmatpush1.msra.mxu0 0.0
        %655 = vmatprep.subr.mxu0 0.0
        %656 = vmatpush1.msra.mxu0 0.0
        %657 = vmatprep.subr.mxu0 0.0
        %658 = vmatpush1.msra.mxu0 0.0
        %659 = vmatprep.subr.mxu0 0.0
        %660 = vmatpush1.msra.mxu0 0.0
        %661 = vmatprep.subr.mxu0 0.0
        %662 = vmatpush1.msra.mxu0 0.0
        %663 = vmatprep.subr.mxu0 0.0
        %664 = vmatpush1.msra.mxu0 0.0
        %665 = vmatprep.subr.mxu0 0.0
        %666 = vmatpush1.msra.mxu0 0.0
        %667 = vmatprep.subr.mxu0 0.0
        %668 = vmatpush1.msra.mxu0 0.0
        %669 = vmatprep.subr.mxu0 0.0
        %670 = vmatpush1.msra.mxu0 0.0
        %671 = vmatprep.subr.mxu0 0.0
        %672 = vmatpush1.msra.mxu0 0.0
        %673 = vmatprep.subr.mxu0 0.0
        %674 = vmatpush1.msra.mxu0 0.0
        %675 = vmatprep.subr.mxu0 0.0
        %676 = vmatpush1.msra.mxu0 0.0
        %677 = vmatprep.subr.mxu0 0.0
        %678 = vmatpush1.msra.mxu0 0.0
        %679 = vmatprep.subr.mxu0 0.0
        %680 = vmatpush1.msra.mxu0 0.0
        %681 = vmatprep.subr.mxu0 %v649
        %682 = vmatpush1.msra.mxu0 %v646
        %683 = vmatprep.subr.mxu0 0.0
        %684 = vmatpush2.msra.mxu0 0.0
        %685 = vmatprep.subr.mxu0 0.0
        %686 = vmatpush2.msra.mxu0 0.0
        %687 = vmatprep.subr.mxu0 0.0
        %688 = vmatpush2.msra.mxu0 0.0
        %689 = vmatprep.subr.mxu0 0.0
        %690 = vmatpush2.msra.mxu0 0.0
        %691 = vmatprep.subr.mxu0 0.0
        %692 = vmatpush2.msra.mxu0 0.0
        %693 = vmatprep.subr.mxu0 0.0
        %694 = vmatpush2.msra.mxu0 0.0
        %695 = vmatprep.subr.mxu0 0.0
        %696 = vmatpush2.msra.mxu0 0.0
        %697 = vmatprep.subr.mxu0 0.0
        %698 = vmatpush2.msra.mxu0 0.0
        %699 = vmatprep.subr.mxu0 0.0
        %700 = vmatpush2.msra.mxu0 0.0
        %701 = vmatprep.subr.mxu0 0.0
        %702 = vmatpush2.msra.mxu0 0.0
        %703 = vmatprep.subr.mxu0 0.0
        %704 = vmatpush2.msra.mxu0 0.0
        %705 = vmatprep.subr.mxu0 0.0
        %706 = vmatpush2.msra.mxu0 0.0
        %707 = vmatprep.subr.mxu0 0.0
        %708 = vmatpush2.msra.mxu0 0.0
        %709 = vmatprep.subr.mxu0 0.0
        %710 = vmatpush2.msra.mxu0 0.0
        %711 = vmatprep.subr.mxu0 0.0
        %712 = vmatpush2.msra.mxu0 0.0
        %713 = vmatprep.subr.mxu0 0.0
        %714 = vmatpush2.msra.mxu0 0.0
        %715 = vmatprep.mubr.f32.mxu0 0.0
        %716 = vmatmul.mubr.f32.gmra.mxu0 %v643
        %v717 = vpop.f32.mrf.mxu0
        %v718 = vadd.f32 %v640, %v717
        %v719 = vpop.f32.mrf.mxu0
        %v720 = vadd.f32 %v640, %v719
        %721 = vdwg.mxu0
        %v722 = vld [vmem:[%s9] sm:$0xf]
        %724 = vset.pattern.permute.xlu0 0
        %725 = vperm.xlu0 %724, %v722
        %v726 = vpop.permute.xlu0 %725
        %v728 = vmul.f32 %v718, %v726
        %v729 = vmul.f32 %v720, %v726
        %v730 = vadd.f32 %v728, %v389
        %v731 = vadd.f32 %v729, %v391
        %v734 = vcombine.low %v730, %v731
        %736 = vst [vmem:[%s377] sm:$0xff] %v734
        %s737 = sand.u32 %s263, 1
        %s738 = scalar_lea.sflag [#allocation3], %s737
        %s739 = sand.u32 %s263, 1
        %s740 = smul.addr %s739, 8
        %s741 = scalar_lea.vmem [#allocation2], %s740
        // Predicated region
        $region61: #{tpu_custom_call.1} parent=59 // pred_check
          %p742 = pneg %p273
        $region62: #{tpu_custom_call.1} parent=59 // pred_check_branch
          %744 = sbr.rel (%p742) target = $region64
        $region63: #{tpu_custom_call.1} parent=59 // pred_region
          %s745 = smul.u32 2, %s29
          %s747 = ssub.s32 128, 128
          %748 = vsyncadd %s738, %s747
          %s749 = smul.addr %s28, 2
          %s750 = sadd.s32 %s745, %s749
          %s751 = smul.addr %s750, 64
          %s752 = scalar_lea.hbm %s10, %s751
          %s754 = sshll.u32 %s741, 4
          %s755 = int_to_ptr.vmem [resolvable:$true] %s754
          %757 = dma.vmem_to_hbm [thread:$0]  %s755, 128, %s752, %s738
        $region64: #{tpu_custom_call.1} parent=59 // pred_fallthru
          _
      $region60: #{tpu_custom_call.1} parent=5 // pred_fallthru
        _
      %p758 = scmp.le.s32.totalorder 2, %s19
      // Predicated region
      $region65: #{tpu_custom_call.1} parent=5 // pred_check
        %p759 = pneg %p758
      $region66: #{tpu_custom_call.1} parent=5 // pred_check_branch
        %761 = sbr.rel (%p759) target = $region68
      $region67: #{tpu_custom_call.1} parent=5 // pred_region
        %s762 = ssub.s32 %s19, 2
        // Predicated region
        $region69: #{tpu_custom_call.1} parent=67 // pred_check
          %p763 = pneg %p279
        $region70: #{tpu_custom_call.1} parent=67 // pred_check_branch
          %765 = sbr.rel (%p763) target = $region72
        $region71: #{tpu_custom_call.1} parent=67 // pred_region
          %s766 = sand.u32 %s264, 1
          %s767 = scalar_lea.sflag [#allocation3], %s766
          %s768 = sand.u32 %s264, 1
          %s769 = smul.addr %s768, 8
          %s770 = scalar_lea.vmem [#allocation2], %s769
          %771 = dma.done %s767, 128
        $region72: #{tpu_custom_call.1} parent=67 // pred_fallthru
          _
      $region68: #{tpu_custom_call.1} parent=5 // pred_fallthru
        _
    $region6: #{tpu_custom_call.1} parent=1 // loop_footer
      %s23 = sadd.s32 1, %s19
    $region7: #{tpu_custom_call.1} parent=1 // loop_footer_branch
      %18 = sbr.rel target = $region3
    $region8: #{tpu_custom_call.1} parent=1 // loop_exit
      _
    %772 = vsyncpa [#allocation3], 1
    %s773 = scalar_lea.sflag [#allocation3], 1
    %774 = vsyncpa %s773, 1

</llo_original>
